<compile_context>
chip_gen: v6e
topology: v6e:2x2x1
jax: 0.10.0
libtpu: 0.0.40
codegen_flags: <defaults>
</compile_context>

<pallas_src>
import jax
import jax.numpy as jnp
from jax.experimental import pallas as pl
from jax.experimental.pallas import tpu as pltpu

WINDOW_SIZE = 16                       # window_size in the reference module
K = 3                                  # kernel_size of both convs
C_IN, C1, C2 = 6, 16, 8                # channel widths
L1 = WINDOW_SIZE - (K - 1)             # 14 : length after conv1 (valid conv)
L2 = WINDOW_SIZE - 2 * (K - 1)         # 12 : length after conv2
D_IN = C_IN * WINDOW_SIZE              # 96 : flattened input width
D_H1 = C1 * L1                         # 224: flattened conv1 output width
D_H2 = C2 * L2                         # 96 : flattened conv2 output width (== fc in_features)
FC_OUT = 2
LANE = 128
D_H1_PAD = ((D_H1 + LANE - 1) // LANE) * LANE   # 256 (lane-dense hidden width)
D_WF_PAD = LANE                                 # 128 (lane-dense fc weight width)


def _round_up(x, m):
    return (x + m - 1) // m * m


def cnn_kernel(x_ref, w1_ref, b1_ref, w2_ref, b2_ref, wf_ref, bf_ref, o_ref):
    """One batch tile: relu(relu(X @ W1 + b1) @ W2 + b2) @ WfT + bf.

    x_ref : (BT, 96)   f32 input tile (cast to compute dtype in-kernel)
    w1_ref: (96, 256)  banded conv1 matrix (lane-padded), compute dtype
    b1_ref: (1, 256)   epilogue dtype
    w2_ref: (256, 96)  banded conv2 matrix (row-padded), compute dtype
    b2_ref: (1, 96)    epilogue dtype
    wf_ref: (96, 128)  fc weight, transposed + lane-padded, compute dtype
    bf_ref: (1, 2)     f32
    o_ref : (BT, 2)    f32
    """
    x = x_ref[...].astype(w1_ref.dtype)                              # in-kernel cast (no HBM pass)
    h1 = jnp.dot(x, w1_ref[...], preferred_element_type=b1_ref.dtype)
    h1 = jnp.maximum(h1 + b1_ref[...], 0.0)                          # (BT, 256) epilogue dtype
    h2 = jnp.dot(h1.astype(w2_ref.dtype), w2_ref[...],
                 preferred_element_type=b2_ref.dtype)
    h2 = jnp.maximum(h2 + b2_ref[...], 0.0)                          # (BT, 96)  epilogue dtype
    out = jnp.dot(h2.astype(wf_ref.dtype), wf_ref[...],
                  preferred_element_type=jnp.float32)                # (BT, 128) f32
    o_ref[...] = (out[:, :o_ref.shape[1]] + bf_ref[...]).astype(o_ref.dtype)   # (BT, 2)


def _conv1d_as_dense(w, in_len, out_len):
    """Dense banded matrix D (C_in*in_len, C_out*out_len) so that for channel-major
    flattened activations:  flat_out = flat_in @ D  ==  valid 1-D conv with weight w."""
    c_out, c_in, k = w.shape
    m = jnp.arange(in_len)[:, None]            # input position within a channel
    l = jnp.arange(out_len)[None, :]           # output position within a channel
    tap = m - l                                # which kernel tap connects m -> l
    valid = (tap >= 0) & (tap < k)
    tap_c = jnp.clip(tap, 0, k - 1)
    dense = jnp.where(valid[None, None], w[:, :, tap_c], 0.0)   # (C_out, C_in, in, out)
    dense = jnp.transpose(dense, (1, 2, 0, 3)).reshape(c_in * in_len, c_out * out_len)
    return dense


def cnn_forward(x, w1, b1, w2, b2, wf, bf, *, b_tile=4096,
                compute_dtype=jnp.bfloat16, epilogue_dtype=None):
    """x: (B, 6, 16) NCW.  Weights have PyTorch layouts (O, I, K) / (out, in).

    compute_dtype : MXU operand dtype (bf16 default, f32 accumulation on final matmul).
    epilogue_dtype: dtype of h1/h2 bias+ReLU; defaults to compute_dtype.
                    On v5e (no bf16 VALU) pass epilogue_dtype=jnp.float32.
    """
    if epilogue_dtype is None:
        epilogue_dtype = compute_dtype
    B = x.shape[0]

    # ---- wrapper-side repack (tiny constants / free reshapes, outside the hot loop) ----
    x_flat = x.reshape(B, D_IN)                                     # channel-major flatten, f32

    w1d = _conv1d_as_dense(w1, WINDOW_SIZE, L1)                     # (96, 224)
    w1d = jnp.pad(w1d, ((0, 0), (0, D_H1_PAD - D_H1)))              # (96, 256)
    b1f = jnp.pad(jnp.repeat(b1, L1), (0, D_H1_PAD - D_H1)).reshape(1, D_H1_PAD)

    w2d = _conv1d_as_dense(w2, L1, L2)                              # (224, 96)
    w2d = jnp.pad(w2d, ((0, D_H1_PAD - D_H1), (0, 0)))              # (256, 96)
    b2f = jnp.repeat(b2, L2).reshape(1, D_H2)

    wft = jnp.pad(wf.T, ((0, 0), (0, D_WF_PAD - FC_OUT)))           # (96, 128)
    bff = bf.reshape(1, FC_OUT).astype(jnp.float32)                 # (1, 2)

    # ---- batch tiling: tile is a multiple of 8, capped so the grid has >=2 blocks ----
    B8 = _round_up(B, 8)
    tile = min(_round_up(max(b_tile, 8), 8), B8)
    if B8 >= 16:
        tile = min(tile, _round_up(pl.cdiv(B8, 2), 8))              # >=2 blocks => both TCs on v7x
    B_pad = _round_up(B, tile)
    if B_pad != B:
        x_flat = jnp.pad(x_flat, ((0, B_pad - B), (0, 0)))

    w1c = w1d.astype(compute_dtype)
    w2c = w2d.astype(compute_dtype)
    wfc = wft.astype(compute_dtype)
    b1c = b1f.astype(epilogue_dtype)
    b2c = b2f.astype(epilogue_dtype)

    full = lambda shape: pl.BlockSpec(shape, lambda i: (0, 0))      # weights: resident block
    out = pl.pallas_call(
        cnn_kernel,
        out_shape=jax.ShapeDtypeStruct((B_pad, FC_OUT), jnp.float32),
        grid=(B_pad // tile,),
        in_specs=[
            pl.BlockSpec((tile, D_IN), lambda i: (i, 0)),           # x tile, pipelined
            full((D_IN, D_H1_PAD)),
            full((1, D_H1_PAD)),
            full((D_H1_PAD, D_H2)),
            full((1, D_H2)),
            full((D_H2, D_WF_PAD)),
            full((1, FC_OUT)),
        ],
        out_specs=pl.BlockSpec((tile, FC_OUT), lambda i: (i, 0)),   # narrow output: no pad writeback
        compiler_params=pltpu.CompilerParams(
            dimension_semantics=("parallel",),                      # megacore sharding on v7x
            vmem_limit_bytes=32 * 1024 * 1024,                      # safe on v5e/v6e/v7x
        ),
    )(x_flat, w1c, b1c, w2c, b2c, wfc, bff)

    return out[:B, :]


def cnn_reference(x, w1, b1, w2, b2, wf, bf):
    """Pure-JAX f32 reference using lax.conv for cross-checking the kernel."""
    dn = jax.lax.conv_dimension_numbers(x.shape, w1.shape, ('NCH', 'OIH', 'NCH'))
    h1 = jax.lax.conv_general_dilated(x, w1, (1,), 'VALID', dimension_numbers=dn)
    h1 = jnp.maximum(h1 + b1[None, :, None], 0.0)
    dn2 = jax.lax.conv_dimension_numbers(h1.shape, w2.shape, ('NCH', 'OIH', 'NCH'))
    h2 = jax.lax.conv_general_dilated(h1, w2, (1,), 'VALID', dimension_numbers=dn2)
    h2 = jnp.maximum(h2 + b2[None, :, None], 0.0)
    return h2.reshape(h2.shape[0], D_H2) @ wf.T + bf[None, :]


if __name__ == "__main__":
    key = jax.random.PRNGKey(0)
    kx, k1, kb1, k2, kb2, kf, kbf = jax.random.split(key, 7)

    # Deterministic synthetic parameters (shapes match the PyTorch module).
    w1 = 0.1 * jax.random.normal(k1, (C1, C_IN, K), dtype=jnp.float32)
    b1 = 0.1 * jax.random.normal(kb1, (C1,), dtype=jnp.float32)
    w2 = 0.1 * jax.random.normal(k2, (C2, C1, K), dtype=jnp.float32)
    b2 = 0.1 * jax.random.normal(kb2, (C2,), dtype=jnp.float32)
    wf = 0.1 * jax.random.normal(kf, (FC_OUT, D_H2), dtype=jnp.float32)
    bf = 0.1 * jax.random.normal(kbf, (FC_OUT,), dtype=jnp.float32)

    # --- small batch (B=2), single grid block ---
    B = 2
    x = jax.random.normal(kx, (B, C_IN, WINDOW_SIZE), dtype=jnp.float32)
    ref = cnn_reference(x, w1, b1, w2, b2, wf, bf)

    # f32 operands + f32 epilogue: exact-ish match.
    out_f32 = jax.block_until_ready(
        cnn_forward(x, w1, b1, w2, b2, wf, bf, compute_dtype=jnp.float32))
    assert out_f32.shape == (B, FC_OUT)
    assert jnp.allclose(out_f32, ref, atol=1e-4, rtol=1e-4), (out_f32, ref)

    # bf16 operands + bf16 epilogue (default perf path): f32 final accumulation.
    out_bf16 = jax.block_until_ready(cnn_forward(x, w1, b1, w2, b2, wf, bf))
    assert out_bf16.shape == (B, FC_OUT)
    assert jnp.allclose(out_bf16, ref, atol=5e-2, rtol=5e-2), (out_bf16, ref)

    # --- odd batch (B=13): exercises 8-row padding and a 2-block grid ---
    B2 = 13
    x2 = jax.random.normal(kx, (B2, C_IN, WINDOW_SIZE), dtype=jnp.float32)
    ref2 = cnn_reference(x2, w1, b1, w2, b2, wf, bf)
    out2 = jax.block_until_ready(cnn_forward(x2, w1, b1, w2, b2, wf, bf))
    assert out2.shape == (B2, FC_OUT)
    assert jnp.allclose(out2, ref2, atol=5e-2, rtol=5e-2), (out2, ref2)

    print("KERNEL_OK")
</pallas_src>

<mosaic_0001>
module attributes {stable_mosaic.version = 11 : i64} {
  func.func @cnn_kernel(%arg0: i32, %arg1: memref<8x96xf32, #tpu.memory_space<vmem>>, %arg2: memref<96x256xf32, #tpu.memory_space<vmem>>, %arg3: memref<1x256xf32, #tpu.memory_space<vmem>>, %arg4: memref<256x96xf32, #tpu.memory_space<vmem>>, %arg5: memref<1x96xf32, #tpu.memory_space<vmem>>, %arg6: memref<96x128xf32, #tpu.memory_space<vmem>>, %arg7: memref<1x2xf32, #tpu.memory_space<vmem>>, %arg8: memref<8x2xf32, #tpu.memory_space<vmem>>) attributes {dimension_semantics = [#tpu.dimension_semantics<parallel>], iteration_bounds = array<i64: 1>, scalar_prefetch = 0 : i64, scratch_operands = 0 : i64, tpu.core_type = #tpu.core_type<tc>, window_params = [{transform_indices = @transform_0, window_bounds = array<i64: 8, 96>}, {pipeline_mode = #tpu.pipeline_mode<synchronous>, transform_indices = @transform_1, window_bounds = array<i64: 96, 256>}, {pipeline_mode = #tpu.pipeline_mode<synchronous>, transform_indices = @transform_2, window_bounds = array<i64: 1, 256>}, {pipeline_mode = #tpu.pipeline_mode<synchronous>, transform_indices = @transform_3, window_bounds = array<i64: 256, 96>}, {pipeline_mode = #tpu.pipeline_mode<synchronous>, transform_indices = @transform_4, window_bounds = array<i64: 1, 96>}, {pipeline_mode = #tpu.pipeline_mode<synchronous>, transform_indices = @transform_5, window_bounds = array<i64: 96, 128>}, {pipeline_mode = #tpu.pipeline_mode<synchronous>, transform_indices = @transform_6, window_bounds = array<i64: 1, 2>}, {transform_indices = @transform_7, window_bounds = array<i64: 8, 2>}]} {
    %c0 = arith.constant 0 : index
    %c0_0 = arith.constant 0 : index
    %0 = vector.load %arg1[%c0, %c0_0] : memref<8x96xf32, #tpu.memory_space<vmem>>, vector<8x96xf32>
    %c0_1 = arith.constant 0 : index
    %c0_2 = arith.constant 0 : index
    %1 = vector.load %arg2[%c0_1, %c0_2] : memref<96x256xf32, #tpu.memory_space<vmem>>, vector<96x256xf32>
    %cst = arith.constant dense<0.000000e+00> : vector<8x256xf32>
    %2 = tpu.matmul %0, %1, %cst {dimension_numbers = #tpu.dot_dimension_numbers<[1], [0], [0], [1], [0, 0, 1, 1], [], []>} : vector<8x96xf32>, vector<96x256xf32>, vector<8x256xf32> -> vector<8x256xf32>
    %c0_3 = arith.constant 0 : index
    %c0_4 = arith.constant 0 : index
    %3 = vector.load %arg3[%c0_3, %c0_4] : memref<1x256xf32, #tpu.memory_space<vmem>>, vector<1x256xf32>
    %4 = vector.broadcast %3 : vector<1x256xf32> to vector<8x256xf32>
    %5 = arith.addf %2, %4 : vector<8x256xf32>
    %cst_5 = arith.constant 0.000000e+00 : f32
    %6 = vector.broadcast %cst_5 : f32 to vector<8x256xf32>
    %7 = arith.maximumf %5, %6 : vector<8x256xf32>
    %c0_6 = arith.constant 0 : index
    %c0_7 = arith.constant 0 : index
    %8 = vector.load %arg4[%c0_6, %c0_7] : memref<256x96xf32, #tpu.memory_space<vmem>>, vector<256x96xf32>
    %cst_8 = arith.constant dense<0.000000e+00> : vector<8x96xf32>
    %9 = tpu.matmul %7, %8, %cst_8 {dimension_numbers = #tpu.dot_dimension_numbers<[1], [0], [0], [1], [0, 0, 1, 1], [], []>} : vector<8x256xf32>, vector<256x96xf32>, vector<8x96xf32> -> vector<8x96xf32>
    %c0_9 = arith.constant 0 : index
    %c0_10 = arith.constant 0 : index
    %10 = vector.load %arg5[%c0_9, %c0_10] : memref<1x96xf32, #tpu.memory_space<vmem>>, vector<1x96xf32>
    %11 = vector.broadcast %10 : vector<1x96xf32> to vector<8x96xf32>
    %12 = arith.addf %9, %11 : vector<8x96xf32>
    %cst_11 = arith.constant 0.000000e+00 : f32
    %13 = vector.broadcast %cst_11 : f32 to vector<8x96xf32>
    %14 = arith.maximumf %12, %13 : vector<8x96xf32>
    %c0_12 = arith.constant 0 : index
    %c0_13 = arith.constant 0 : index
    %15 = vector.load %arg6[%c0_12, %c0_13] : memref<96x128xf32, #tpu.memory_space<vmem>>, vector<96x128xf32>
    %cst_14 = arith.constant dense<0.000000e+00> : vector<8x128xf32>
    %16 = tpu.matmul %14, %15, %cst_14 {dimension_numbers = #tpu.dot_dimension_numbers<[1], [0], [0], [1], [0, 0, 1, 1], [], []>} : vector<8x96xf32>, vector<96x128xf32>, vector<8x128xf32> -> vector<8x128xf32>
    %17 = vector.extract_strided_slice %16 {offsets = [0, 0], sizes = [8, 2], strides = [1, 1]} : vector<8x128xf32> to vector<8x2xf32>
    %c0_15 = arith.constant 0 : index
    %c0_16 = arith.constant 0 : index
    %18 = vector.load %arg7[%c0_15, %c0_16] : memref<1x2xf32, #tpu.memory_space<vmem>>, vector<1x2xf32>
    %19 = vector.broadcast %18 : vector<1x2xf32> to vector<8x2xf32>
    %20 = arith.addf %17, %19 : vector<8x2xf32>
    %c0_17 = arith.constant 0 : index
    %c0_18 = arith.constant 0 : index
    %21 = vector.load %arg8[%c0_17, %c0_18] : memref<8x2xf32, #tpu.memory_space<vmem>>, vector<8x2xf32>
    tpu.vector_store %arg8[%c0_17, %c0_18], %20 {strides = array<i32>} : memref<8x2xf32, #tpu.memory_space<vmem>>, vector<8x2xf32>,
    return
  }
  func.func @transform_0(%arg0: i32) -> (i32, i32) {
    %c0_i32 = arith.constant 0 : i32
    %c0_i32_0 = arith.constant 0 : i32
    return %arg0, %c0_i32 : i32, i32
  }
  func.func @transform_1(%arg0: i32) -> (i32, i32) {
    %c0_i32 = arith.constant 0 : i32
    %c0_i32_0 = arith.constant 0 : i32
    %c0_i32_1 = arith.constant 0 : i32
    return %c0_i32, %c0_i32_0 : i32, i32
  }
  func.func @transform_2(%arg0: i32) -> (i32, i32) {
    %c0_i32 = arith.constant 0 : i32
    %c0_i32_0 = arith.constant 0 : i32
    %c0_i32_1 = arith.constant 0 : i32
    return %c0_i32, %c0_i32_0 : i32, i32
  }
  func.func @transform_3(%arg0: i32) -> (i32, i32) {
    %c0_i32 = arith.constant 0 : i32
    %c0_i32_0 = arith.constant 0 : i32
    %c0_i32_1 = arith.constant 0 : i32
    return %c0_i32, %c0_i32_0 : i32, i32
  }
  func.func @transform_4(%arg0: i32) -> (i32, i32) {
    %c0_i32 = arith.constant 0 : i32
    %c0_i32_0 = arith.constant 0 : i32
    %c0_i32_1 = arith.constant 0 : i32
    return %c0_i32, %c0_i32_0 : i32, i32
  }
  func.func @transform_5(%arg0: i32) -> (i32, i32) {
    %c0_i32 = arith.constant 0 : i32
    %c0_i32_0 = arith.constant 0 : i32
    %c0_i32_1 = arith.constant 0 : i32
    return %c0_i32, %c0_i32_0 : i32, i32
  }
  func.func @transform_6(%arg0: i32) -> (i32, i32) {
    %c0_i32 = arith.constant 0 : i32
    %c0_i32_0 = arith.constant 0 : i32
    %c0_i32_1 = arith.constant 0 : i32
    return %c0_i32, %c0_i32_0 : i32, i32
  }
  func.func @transform_7(%arg0: i32) -> (i32, i32) {
    %c0_i32 = arith.constant 0 : i32
    %c0_i32_0 = arith.constant 0 : i32
    return %arg0, %c0_i32 : i32, i32
  }
}

</mosaic_0001>

<llo_original>
// kernel: tpu_custom_call.1
$region0: #{tpu_custom_call.1}
  #allocation0 [shape = 'u32[]', space=smem, size = 0x4, offset = 0x4, fixed_abs, tag = 'smem constant byte address 0x4 - core index']
  #allocation1 [shape = 'u32[144,128]{1,0:T(1,128)}', space=vmem, size = 0x12000, scoped, tag = 'internal scratch']
  %s0 = inlined_call_operand.vmem [shape: f32[8,96], index: 0, kind: input, shape index: {}]
  %s1 = inlined_call_operand.vmem [shape: f32[96,256], index: 1, kind: input, shape index: {}]
  %s2 = inlined_call_operand.vmem [shape: f32[1,256], index: 2, kind: input, shape index: {}]
  %s3 = inlined_call_operand.vmem [shape: f32[256,96], index: 3, kind: input, shape index: {}]
  %s4 = inlined_call_operand.vmem [shape: f32[1,96], index: 4, kind: input, shape index: {}]
  %s5 = inlined_call_operand.vmem [shape: f32[96,128], index: 5, kind: input, shape index: {}]
  %s6 = inlined_call_operand.vmem [shape: f32[1,2], index: 6, kind: input, shape index: {}]
  %s7 = inlined_call_operand.vmem [shape: f32[8,2], index: 7, kind: output, shape index: {}]
  %s8 = sld [smem:[#allocation0]]
  $region38: #{tpu_custom_call.1} parent=0
    _
  %s10 = ssub.s32 1, %s8
  %s11 = scalar_select 0, %s10, %s8
  // Predicated region
  $region2: #{tpu_custom_call.1} parent=0 // pred_check
    _
  $region3: #{tpu_custom_call.1} parent=0 // pred_check_branch
    %13 = sbr.rel (0) target = $region5
  $region4: #{tpu_custom_call.1} parent=0 // pred_region
    _
  $region5: #{tpu_custom_call.1} parent=0 // pred_fallthru
    _
  // Predicated region
  $region6: #{tpu_custom_call.1} parent=0 // pred_check
    _
  $region7: #{tpu_custom_call.1} parent=0 // pred_check_branch
    %15 = sbr.rel (0) target = $region9
  $region8: #{tpu_custom_call.1} parent=0 // pred_region
    _
  $region9: #{tpu_custom_call.1} parent=0 // pred_fallthru
    _
  // Predicated region
  $region10: #{tpu_custom_call.1} parent=0 // pred_check
    _
  $region11: #{tpu_custom_call.1} parent=0 // pred_check_branch
    %17 = sbr.rel (0) target = $region13
  $region12: #{tpu_custom_call.1} parent=0 // pred_region
    _
  $region13: #{tpu_custom_call.1} parent=0 // pred_fallthru
    _
  // Predicated region
  $region14: #{tpu_custom_call.1} parent=0 // pred_check
    _
  $region15: #{tpu_custom_call.1} parent=0 // pred_check_branch
    %19 = sbr.rel (0) target = $region17
  $region16: #{tpu_custom_call.1} parent=0 // pred_region
    _
  $region17: #{tpu_custom_call.1} parent=0 // pred_fallthru
    _
  // Predicated region
  $region18: #{tpu_custom_call.1} parent=0 // pred_check
    _
  $region19: #{tpu_custom_call.1} parent=0 // pred_check_branch
    %21 = sbr.rel (0) target = $region21
  $region20: #{tpu_custom_call.1} parent=0 // pred_region
    _
  $region21: #{tpu_custom_call.1} parent=0 // pred_fallthru
    _
  // Predicated region
  $region22: #{tpu_custom_call.1} parent=0 // pred_check
    _
  $region23: #{tpu_custom_call.1} parent=0 // pred_check_branch
    %23 = sbr.rel (0) target = $region25
  $region24: #{tpu_custom_call.1} parent=0 // pred_region
    _
  $region25: #{tpu_custom_call.1} parent=0 // pred_fallthru
    _
  // Predicated region
  $region26: #{tpu_custom_call.1} parent=0 // pred_check
    _
  $region27: #{tpu_custom_call.1} parent=0 // pred_check_branch
    %25 = sbr.rel (0) target = $region29
  $region28: #{tpu_custom_call.1} parent=0 // pred_region
    _
  $region29: #{tpu_custom_call.1} parent=0 // pred_fallthru
    _
  %v26 = vld [vmem:[%s0] sm:$0xff]
  %v27 = vld [vmem:[%s1] sm:$0xff]
  %v28 = vld [vmem:[%s1 + $0x8] sm:$0xff]
  %v29 = vld [vmem:[%s1 + $0x10] sm:$0xff]
  %v30 = vld [vmem:[%s1 + $0x18] sm:$0xff]
  %v31 = vld [vmem:[%s1 + $0x20] sm:$0xff]
  %v32 = vld [vmem:[%s1 + $0x28] sm:$0xff]
  %v33 = vld [vmem:[%s1 + $0x30] sm:$0xff]
  %v34 = vld [vmem:[%s1 + $0x38] sm:$0xff]
  %v35 = vld [vmem:[%s1 + $0x40] sm:$0xff]
  %v36 = vld [vmem:[%s1 + $0x48] sm:$0xff]
  %v37 = vld [vmem:[%s1 + $0x50] sm:$0xff]
  %v38 = vld [vmem:[%s1 + $0x58] sm:$0xff]
  %v39 = vld [vmem:[%s1 + $0x60] sm:$0xff]
  %v40 = vld [vmem:[%s1 + $0x68] sm:$0xff]
  %v41 = vld [vmem:[%s1 + $0x70] sm:$0xff]
  %v42 = vld [vmem:[%s1 + $0x78] sm:$0xff]
  %v43 = vld [vmem:[%s1 + $0x80] sm:$0xff]
  %v44 = vld [vmem:[%s1 + $0x88] sm:$0xff]
  %v45 = vld [vmem:[%s1 + $0x90] sm:$0xff]
  %v46 = vld [vmem:[%s1 + $0x98] sm:$0xff]
  %v47 = vld [vmem:[%s1 + $0xa0] sm:$0xff]
  %v48 = vld [vmem:[%s1 + $0xa8] sm:$0xff]
  %v49 = vld [vmem:[%s1 + $0xb0] sm:$0xff]
  %v50 = vld [vmem:[%s1 + $0xb8] sm:$0xff]
  %v51 = vld [vmem:[%s2] sm:$0x3]
  %v53 = vlaneseq
  %v54 = vshrl.u32 %v53, 7
  %v55 = vsub.s32 0, %v54
  %v56 = vrot.slane %v51, %v55
  %v57 = vlaneseq
  %v58 = vshrl.u32 %v57, 7
  %v59 = vsub.s32 1, %v58
  %v60 = vrot.slane %v51, %v59
  %vm63 = vcmask 785408
  %v65 = vsel %vm63, %v26, 0
  %67 = vmatprep.subr.mxu0 0.0
  %68 = vmatpush1.msra.mxu0 0.0
  %69 = vmatprep.subr.mxu0 0.0
  %70 = vmatpush1.msra.mxu0 0.0
  %71 = vmatprep.subr.mxu0 0.0
  %72 = vmatpush1.msra.mxu0 0.0
  %73 = vmatprep.subr.mxu0 0.0
  %74 = vmatpush1.msra.mxu0 0.0
  %75 = vmatprep.subr.mxu0 %v50
  %76 = vmatpush1.msra.mxu0 %v49
  %77 = vmatprep.subr.mxu0 %v48
  %78 = vmatpush1.msra.mxu0 %v47
  %79 = vmatprep.subr.mxu0 %v46
  %80 = vmatpush1.msra.mxu0 %v45
  %81 = vmatprep.subr.mxu0 %v44
  %82 = vmatpush1.msra.mxu0 %v43
  %83 = vmatprep.subr.mxu0 %v42
  %84 = vmatpush1.msra.mxu0 %v41
  %85 = vmatprep.subr.mxu0 %v40
  %86 = vmatpush1.msra.mxu0 %v39
  %87 = vmatprep.subr.mxu0 %v38
  %88 = vmatpush1.msra.mxu0 %v37
  %89 = vmatprep.subr.mxu0 %v36
  %90 = vmatpush1.msra.mxu0 %v35
  %91 = vmatprep.subr.mxu0 %v34
  %92 = vmatpush1.msra.mxu0 %v33
  %93 = vmatprep.subr.mxu0 %v32
  %94 = vmatpush1.msra.mxu0 %v31
  %95 = vmatprep.subr.mxu0 %v30
  %96 = vmatpush1.msra.mxu0 %v29
  %97 = vmatprep.subr.mxu0 %v28
  %98 = vmatpush1.msra.mxu0 %v27
  %99 = vmatprep.subr.mxu0 0.0
  %100 = vmatpush2.msra.mxu0 0.0
  %101 = vmatprep.subr.mxu0 0.0
  %102 = vmatpush2.msra.mxu0 0.0
  %103 = vmatprep.subr.mxu0 0.0
  %104 = vmatpush2.msra.mxu0 0.0
  %105 = vmatprep.subr.mxu0 0.0
  %106 = vmatpush2.msra.mxu0 0.0
  %107 = vmatprep.subr.mxu0 0.0
  %108 = vmatpush2.msra.mxu0 0.0
  %109 = vmatprep.subr.mxu0 0.0
  %110 = vmatpush2.msra.mxu0 0.0
  %111 = vmatprep.subr.mxu0 0.0
  %112 = vmatpush2.msra.mxu0 0.0
  %113 = vmatprep.subr.mxu0 0.0
  %114 = vmatpush2.msra.mxu0 0.0
  %115 = vmatprep.subr.mxu0 0.0
  %116 = vmatpush2.msra.mxu0 0.0
  %117 = vmatprep.subr.mxu0 0.0
  %118 = vmatpush2.msra.mxu0 0.0
  %119 = vmatprep.subr.mxu0 0.0
  %120 = vmatpush2.msra.mxu0 0.0
  %121 = vmatprep.subr.mxu0 0.0
  %122 = vmatpush2.msra.mxu0 0.0
  %123 = vmatprep.subr.mxu0 0.0
  %124 = vmatpush2.msra.mxu0 0.0
  %125 = vmatprep.subr.mxu0 0.0
  %126 = vmatpush2.msra.mxu0 0.0
  %127 = vmatprep.subr.mxu0 0.0
  %128 = vmatpush2.msra.mxu0 0.0
  %129 = vmatprep.subr.mxu0 0.0
  %130 = vmatpush2.msra.mxu0 0.0
  %131 = vmatprep.mubr.f32.mxu0 0.0
  %132 = vmatmul.mubr.f32.gmra.mxu0 %v65
  %v133 = vpop.f32.mrf.mxu0
  %v134 = vadd.f32 %v56, %v133
  %v135 = vpop.f32.mrf.mxu0
  %v136 = vadd.f32 %v60, %v135
  %137 = vdwg.mxu0
  %v138 = vmax.f32 %v134, 0.0
  %v139 = vmax.f32 %v136, 0.0
  %v140 = vld [vmem:[%s3] sm:$0xff]
  %v141 = vld [vmem:[%s3 + $0x8] sm:$0xff]
  %v142 = vld [vmem:[%s3 + $0x10] sm:$0xff]
  %v143 = vld [vmem:[%s3 + $0x18] sm:$0xff]
  %v144 = vld [vmem:[%s3 + $0x20] sm:$0xff]
  %v145 = vld [vmem:[%s3 + $0x28] sm:$0xff]
  %v146 = vld [vmem:[%s3 + $0x30] sm:$0xff]
  %v147 = vld [vmem:[%s3 + $0x38] sm:$0xff]
  %v148 = vld [vmem:[%s3 + $0x40] sm:$0xff]
  %v149 = vld [vmem:[%s3 + $0x48] sm:$0xff]
  %v150 = vld [vmem:[%s3 + $0x50] sm:$0xff]
  %v151 = vld [vmem:[%s3 + $0x58] sm:$0xff]
  %v152 = vld [vmem:[%s3 + $0x60] sm:$0xff]
  %v153 = vld [vmem:[%s3 + $0x68] sm:$0xff]
  %v154 = vld [vmem:[%s3 + $0x70] sm:$0xff]
  %v155 = vld [vmem:[%s3 + $0x78] sm:$0xff]
  %v156 = vld [vmem:[%s3 + $0x80] sm:$0xff]
  %v157 = vld [vmem:[%s3 + $0x88] sm:$0xff]
  %v158 = vld [vmem:[%s3 + $0x90] sm:$0xff]
  %v159 = vld [vmem:[%s3 + $0x98] sm:$0xff]
  %v160 = vld [vmem:[%s3 + $0xa0] sm:$0xff]
  %v161 = vld [vmem:[%s3 + $0xa8] sm:$0xff]
  %v162 = vld [vmem:[%s3 + $0xb0] sm:$0xff]
  %v163 = vld [vmem:[%s3 + $0xb8] sm:$0xff]
  %v164 = vld [vmem:[%s3 + $0xc0] sm:$0xff]
  %v165 = vld [vmem:[%s3 + $0xc8] sm:$0xff]
  %v166 = vld [vmem:[%s3 + $0xd0] sm:$0xff]
  %v167 = vld [vmem:[%s3 + $0xd8] sm:$0xff]
  %v168 = vld [vmem:[%s3 + $0xe0] sm:$0xff]
  %v169 = vld [vmem:[%s3 + $0xe8] sm:$0xff]
  %v170 = vld [vmem:[%s3 + $0xf0] sm:$0xff]
  %v171 = vld [vmem:[%s3 + $0xf8] sm:$0xff]
  %v172 = vld [vmem:[%s4] sm:$0x1]
  %v174 = vlaneseq
  %v175 = vshrl.u32 %v174, 7
  %v176 = vsub.s32 0, %v175
  %v177 = vrot.slane %v172, %v176
  %179 = vmatprep.subr.mxu0 0.0
  %180 = vmatpush1.msra.mxu0 %v155
  %181 = vmatprep.subr.mxu0 0.0
  %182 = vmatpush1.msra.mxu0 %v154
  %183 = vmatprep.subr.mxu0 0.0
  %184 = vmatpush1.msra.mxu0 %v153
  %185 = vmatprep.subr.mxu0 0.0
  %186 = vmatpush1.msra.mxu0 %v152
  %187 = vmatprep.subr.mxu0 0.0
  %188 = vmatpush1.msra.mxu0 %v151
  %189 = vmatprep.subr.mxu0 0.0
  %190 = vmatpush1.msra.mxu0 %v150
  %191 = vmatprep.subr.mxu0 0.0
  %192 = vmatpush1.msra.mxu0 %v149
  %193 = vmatprep.subr.mxu0 0.0
  %194 = vmatpush1.msra.mxu0 %v148
  %195 = vmatprep.subr.mxu0 0.0
  %196 = vmatpush1.msra.mxu0 %v147
  %197 = vmatprep.subr.mxu0 0.0
  %198 = vmatpush1.msra.mxu0 %v146
  %199 = vmatprep.subr.mxu0 0.0
  %200 = vmatpush1.msra.mxu0 %v145
  %201 = vmatprep.subr.mxu0 0.0
  %202 = vmatpush1.msra.mxu0 %v144
  %203 = vmatprep.subr.mxu0 0.0
  %204 = vmatpush1.msra.mxu0 %v143
  %205 = vmatprep.subr.mxu0 0.0
  %206 = vmatpush1.msra.mxu0 %v142
  %207 = vmatprep.subr.mxu0 0.0
  %208 = vmatpush1.msra.mxu0 %v141
  %209 = vmatprep.subr.mxu0 0.0
  %210 = vmatpush1.msra.mxu0 %v140
  %211 = vmatprep.subr.mxu0 0.0
  %212 = vmatpush2.msra.mxu0 %v171
  %213 = vmatprep.subr.mxu0 0.0
  %214 = vmatpush2.msra.mxu0 %v170
  %215 = vmatprep.subr.mxu0 0.0
  %216 = vmatpush2.msra.mxu0 %v169
  %217 = vmatprep.subr.mxu0 0.0
  %218 = vmatpush2.msra.mxu0 %v168
  %219 = vmatprep.subr.mxu0 0.0
  %220 = vmatpush2.msra.mxu0 %v167
  %221 = vmatprep.subr.mxu0 0.0
  %222 = vmatpush2.msra.mxu0 %v166
  %223 = vmatprep.subr.mxu0 0.0
  %224 = vmatpush2.msra.mxu0 %v165
  %225 = vmatprep.subr.mxu0 0.0
  %226 = vmatpush2.msra.mxu0 %v164
  %227 = vmatprep.subr.mxu0 0.0
  %228 = vmatpush2.msra.mxu0 %v163
  %229 = vmatprep.subr.mxu0 0.0
  %230 = vmatpush2.msra.mxu0 %v162
  %231 = vmatprep.subr.mxu0 0.0
  %232 = vmatpush2.msra.mxu0 %v161
  %233 = vmatprep.subr.mxu0 0.0
  %234 = vmatpush2.msra.mxu0 %v160
  %235 = vmatprep.subr.mxu0 0.0
  %236 = vmatpush2.msra.mxu0 %v159
  %237 = vmatprep.subr.mxu0 0.0
  %238 = vmatpush2.msra.mxu0 %v158
  %239 = vmatprep.subr.mxu0 0.0
  %240 = vmatpush2.msra.mxu0 %v157
  %241 = vmatprep.subr.mxu0 0.0
  %242 = vmatpush2.msra.mxu0 %v156
  %243 = vmatprep.mubr.f32.mxu0 %v139
  %244 = vmatmul.mubr.f32.gmra.mxu0 %v138
  %v245 = vpop.f32.mrf.mxu0
  %v246 = vadd.f32 %v177, %v245
  %v247 = vpop.f32.mrf.mxu0
  %248 = vdwg.mxu0
  %v249 = vmax.f32 %v246, 0.0
  %v250 = vld [vmem:[%s5] sm:$0xff]
  %v251 = vld [vmem:[%s5 + $0x8] sm:$0xff]
  %v252 = vld [vmem:[%s5 + $0x10] sm:$0xff]
  %v253 = vld [vmem:[%s5 + $0x18] sm:$0xff]
  %v254 = vld [vmem:[%s5 + $0x20] sm:$0xff]
  %v255 = vld [vmem:[%s5 + $0x28] sm:$0xff]
  %v256 = vld [vmem:[%s5 + $0x30] sm:$0xff]
  %v257 = vld [vmem:[%s5 + $0x38] sm:$0xff]
  %v258 = vld [vmem:[%s5 + $0x40] sm:$0xff]
  %v259 = vld [vmem:[%s5 + $0x48] sm:$0xff]
  %v260 = vld [vmem:[%s5 + $0x50] sm:$0xff]
  %v261 = vld [vmem:[%s5 + $0x58] sm:$0xff]
  %v263 = vsel %vm63, %v249, 0
  %265 = vmatprep.subr.mxu0 0.0
  %266 = vmatpush1.msra.mxu0 0.0
  %267 = vmatprep.subr.mxu0 0.0
  %268 = vmatpush1.msra.mxu0 0.0
  %269 = vmatprep.subr.mxu0 0.0
  %270 = vmatpush1.msra.mxu0 0.0
  %271 = vmatprep.subr.mxu0 0.0
  %272 = vmatpush1.msra.mxu0 0.0
  %273 = vmatprep.subr.mxu0 0.0
  %274 = vmatpush1.msra.mxu0 %v261
  %275 = vmatprep.subr.mxu0 0.0
  %276 = vmatpush1.msra.mxu0 %v260
  %277 = vmatprep.subr.mxu0 0.0
  %278 = vmatpush1.msra.mxu0 %v259
  %279 = vmatprep.subr.mxu0 0.0
  %280 = vmatpush1.msra.mxu0 %v258
  %281 = vmatprep.subr.mxu0 0.0
  %282 = vmatpush1.msra.mxu0 %v257
  %283 = vmatprep.subr.mxu0 0.0
  %284 = vmatpush1.msra.mxu0 %v256
  %285 = vmatprep.subr.mxu0 0.0
  %286 = vmatpush1.msra.mxu0 %v255
  %287 = vmatprep.subr.mxu0 0.0
  %288 = vmatpush1.msra.mxu0 %v254
  %289 = vmatprep.subr.mxu0 0.0
  %290 = vmatpush1.msra.mxu0 %v253
  %291 = vmatprep.subr.mxu0 0.0
  %292 = vmatpush1.msra.mxu0 %v252
  %293 = vmatprep.subr.mxu0 0.0
  %294 = vmatpush1.msra.mxu0 %v251
  %295 = vmatprep.subr.mxu0 0.0
  %296 = vmatpush1.msra.mxu0 %v250
  %297 = vmatprep.subr.mxu0 0.0
  %298 = vmatpush2.msra.mxu0 0.0
  %299 = vmatprep.subr.mxu0 0.0
  %300 = vmatpush2.msra.mxu0 0.0
  %301 = vmatprep.subr.mxu0 0.0
  %302 = vmatpush2.msra.mxu0 0.0
  %303 = vmatprep.subr.mxu0 0.0
  %304 = vmatpush2.msra.mxu0 0.0
  %305 = vmatprep.subr.mxu0 0.0
  %306 = vmatpush2.msra.mxu0 0.0
  %307 = vmatprep.subr.mxu0 0.0
  %308 = vmatpush2.msra.mxu0 0.0
  %309 = vmatprep.subr.mxu0 0.0
  %310 = vmatpush2.msra.mxu0 0.0
  %311 = vmatprep.subr.mxu0 0.0
  %312 = vmatpush2.msra.mxu0 0.0
  %313 = vmatprep.subr.mxu0 0.0
  %314 = vmatpush2.msra.mxu0 0.0
  %315 = vmatprep.subr.mxu0 0.0
  %316 = vmatpush2.msra.mxu0 0.0
  %317 = vmatprep.subr.mxu0 0.0
  %318 = vmatpush2.msra.mxu0 0.0
  %319 = vmatprep.subr.mxu0 0.0
  %320 = vmatpush2.msra.mxu0 0.0
  %321 = vmatprep.subr.mxu0 0.0
  %322 = vmatpush2.msra.mxu0 0.0
  %323 = vmatprep.subr.mxu0 0.0
  %324 = vmatpush2.msra.mxu0 0.0
  %325 = vmatprep.subr.mxu0 0.0
  %326 = vmatpush2.msra.mxu0 0.0
  %327 = vmatprep.subr.mxu0 0.0
  %328 = vmatpush2.msra.mxu0 0.0
  %329 = vmatprep.mubr.f32.mxu0 0.0
  %330 = vmatmul.mubr.f32.gmra.mxu0 %v263
  %v331 = vpop.f32.mrf.mxu0
  %v332 = vadd.f32 0.0, %v331
  %v333 = vpop.f32.mrf.mxu0
  %334 = vdwg.mxu0
  %v335 = vld [vmem:[%s6] sm:$0x1]
  %v337 = vlaneseq
  %v338 = vshrl.u32 %v337, 7
  %v339 = vsub.s32 0, %v338
  %v340 = vrot.slane %v335, %v339
  %v342 = vadd.f32 %v332, %v340
  %vm343 = vcmask 15360
  %344 = vst.msk [vmem:[%s7] sm:$0xff] %vm343, %v342
  // Predicated region
  $region30: #{tpu_custom_call.1} parent=0 // pred_check
    _
  $region31: #{tpu_custom_call.1} parent=0 // pred_check_branch
    %346 = sbr.rel (0) target = $region33
  $region32: #{tpu_custom_call.1} parent=0 // pred_region
    _
  $region33: #{tpu_custom_call.1} parent=0 // pred_fallthru
    _
  // Predicated region
  $region34: #{tpu_custom_call.1} parent=0 // pred_check
    _
  $region35: #{tpu_custom_call.1} parent=0 // pred_check_branch
    %348 = sbr.rel (0) target = $region37
  $region36: #{tpu_custom_call.1} parent=0 // pred_region
    _
  $region37: #{tpu_custom_call.1} parent=0 // pred_fallthru
    _

</llo_original>
